<compile_context>
chip_gen: v7x
topology: tpu7x:2x2x1
jax: 0.10.0
libtpu: 0.0.40
codegen_flags: <defaults>
</compile_context>

<pallas_src>
import functools

import jax
import jax.numpy as jnp
import numpy as np
from jax.experimental import pallas as pl
from jax.experimental.pallas import tpu as pltpu


def _pair(v):
    return (v, v) if isinstance(v, int) else tuple(v)


def _quadruple(v):
    return (v, v, v, v) if isinstance(v, int) else tuple(v)


def _round_up(v, m):
    return ((v + m - 1) // m) * m


def _sort2(a, b):
    return jnp.minimum(a, b), jnp.maximum(a, b)


def _sort3(a, b, c):
    """Full elementwise sort of three arrays (6 min/max ops)."""
    a, b = _sort2(a, b)
    b, c = _sort2(b, c)
    a, b = _sort2(a, b)
    return a, b, c


def _med3(a, b, c):
    """Elementwise median of three (4 min/max ops)."""
    lo = jnp.minimum(a, b)
    hi = jnp.maximum(a, b)
    return jnp.maximum(lo, jnp.minimum(hi, c))


def _median_of_9(p):
    """Paeth median-of-9 exchange network, dead writes pruned (~30 VPU ops).

    Used only on the generic (strided) path when the window has 9 taps."""
    p = list(p)
    p[1], p[2] = _sort2(p[1], p[2])
    p[4], p[5] = _sort2(p[4], p[5])
    p[7], p[8] = _sort2(p[7], p[8])
    p[0], p[1] = _sort2(p[0], p[1])
    p[3], p[4] = _sort2(p[3], p[4])
    p[6], p[7] = _sort2(p[6], p[7])
    p[1], p[2] = _sort2(p[1], p[2])
    p[4], p[5] = _sort2(p[4], p[5])
    p[7], p[8] = _sort2(p[7], p[8])
    p[3] = jnp.maximum(p[0], p[3])          # only max side of sort(0,3) is live
    p[5] = jnp.minimum(p[5], p[8])          # only min side of sort(5,8) is live
    p[4], p[7] = _sort2(p[4], p[7])
    p[6] = jnp.maximum(p[3], p[6])          # only max side of sort(3,6)
    p[4] = jnp.maximum(p[1], p[4])          # only max side of sort(1,4)
    p[2] = jnp.minimum(p[2], p[5])          # only min side of sort(2,5)
    p[4] = jnp.minimum(p[4], p[7])          # only min side of sort(4,7)
    p[4], p[2] = _sort2(p[4], p[2])
    p[4] = jnp.maximum(p[6], p[4])          # only max side of sort(6,4)
    return jnp.minimum(p[4], p[2])          # only min side of sort(4,2)


def _median_select(vals):
    """Elementwise lower median (sorted index (n-1)//2) via min/max networks."""
    n = len(vals)
    m = (n - 1) // 2
    if n == 1:
        return vals[0]
    if n == 9:
        return _median_of_9(vals)
    # Partial selection: fix only positions 0..m; last pass needs mins only.
    vals = list(vals)
    for i in range(m):
        for j in range(i + 1, n):
            vals[i], vals[j] = _sort2(vals[i], vals[j])
    med = vals[m]
    for j in range(m + 1, n):
        med = jnp.minimum(med, vals[j])
    return med


def _ops_per_window(kk):
    if kk == 9:
        return 30
    n, m = kk, (kk - 1) // 2
    return 2 * (m * (n - 1) - m * (m - 1) // 2) + (n - 1 - m)


def _median3x3_kernel(x_ref, o_ref, *, out_h, out_w):
    """3x3 / stride-1 fast path: shared row-sort median-of-9 (~18 ops/output).

    x_ref: (Hp, Wp, C_TILE) padded input slab in VMEM (lane axis = channels)
    o_ref: (out_h, out_w, C_TILE) output slab
    """
    # Three horizontally shifted views: lazy ref slices (only these three loads
    # touch a non-aligned sublane start; everything else is aligned/free).
    c0 = x_ref[:, pl.ds(0, out_w), :]
    c1 = x_ref[:, pl.ds(1, out_w), :]
    c2 = x_ref[:, pl.ds(2, out_w), :]
    # Shared sort of each horizontal 3-tuple: reused by the 3 vertically
    # adjacent outputs -> amortized ~6 min/max per output.
    lo, mid, hi = _sort3(c0, c1, c2)                       # (Hp, out_w, C)
    # Vertical shifts along the leading dim are free vreg-row moves.
    a = jnp.maximum(jnp.maximum(lo[0:out_h], lo[1:out_h + 1]), lo[2:out_h + 2])
    b = _med3(mid[0:out_h], mid[1:out_h + 1], mid[2:out_h + 2])
    c = jnp.minimum(jnp.minimum(hi[0:out_h], hi[1:out_h + 1]), hi[2:out_h + 2])
    o_ref[...] = _med3(a, b, c)


def _median_generic_kernel(x_ref, o_ref, *, kh, kw, sh, sw, out_h, out_w):
    """Generic kernel size / stride path: partial selection network.

    Windows are gathered as lazy ref slices; the strided case falls back to a
    strided value slice of the (unstrided) window region.
    """
    vals = []
    for di in range(kh):
        for dj in range(kw):
            if sh == 1 and sw == 1:
                v = x_ref[pl.ds(di, out_h), pl.ds(dj, out_w), :]
            else:
                v = x_ref[pl.ds(di, sh * (out_h - 1) + 1),
                          pl.ds(dj, sw * (out_w - 1) + 1), :]
                v = v[::sh, ::sw, :]
            vals.append(v)
    o_ref[...] = _median_select(vals)


def _vmem_capacity_bytes():
    try:
        cap = int(getattr(pltpu.get_tpu_info(), "vmem_capacity_bytes", 0))
        if cap > 0:
            return cap
    except Exception:
        pass
    return 64 * 1024 * 1024   # conservative default (v7x per-TensorCore VMEM)


def median_pool2d(x, kernel_size=3, stride=1, padding=0, same=False):
    """Forward pass of MedianPool2d.  x is NCHW."""
    kh, kw = _pair(kernel_size)
    sh, sw = _pair(stride)
    N, C, H, W = x.shape

    # Padding logic (matches MedianPool2d._padding).
    if same:
        ph = max(kh - sh, 0) if H % sh == 0 else max(kh - H % sh, 0)
        pw = max(kw - sw, 0) if W % sw == 0 else max(kw - W % sw, 0)
        p_l = pw // 2
        p_r = pw - p_l
        p_t = ph // 2
        p_b = ph - p_t
    else:
        p_l, p_r, p_t, p_b = _quadruple(padding)

    if p_l or p_r or p_t or p_b:
        xp = jnp.pad(x, ((0, 0), (0, 0), (p_t, p_b), (p_l, p_r)), mode="reflect")
    else:
        xp = x

    Hp = H + p_t + p_b
    Wp = W + p_l + p_r
    out_h = (Hp - kh) // sh + 1
    out_w = (Wp - kw) // sw + 1

    NC = N * C
    kk = kh * kw
    nbytes = x.dtype.itemsize
    fast3 = (kh == 3 and kw == 3 and sh == 1 and sw == 1)

    # --- Generation-aware VMEM sizing ------------------------------------
    vmem_cap = _vmem_capacity_bytes()
    sizing_budget = max(8 * 1024 * 1024, int(vmem_cap * 0.35))
    vmem_limit = max(32 * 1024 * 1024,
                     min(int(vmem_cap * 0.75), 100 * 1024 * 1024))

    # Per-lane working set (bytes) for one grid step: double-buffered in/out
    # blocks plus the live temporaries of the median network.
    if fast3:
        tmp = 3 * Hp * out_w + 6 * out_h * out_w
    else:
        if sh > 1 or sw > 1:
            wh = sh * (out_h - 1) + 1
            ww = sw * (out_w - 1) + 1
        else:
            wh, ww = out_h, out_w
        tmp = (kk + 4) * out_h * out_w + 2 * wh * ww
    per_chan = (2 * Hp * Wp + 2 * out_h * out_w + tmp) * nbytes

    # --- Channel tile selection (multiple of 128, divides NCp) -----------
    NCp = _round_up(NC, 128)
    n_lanes = NCp // 128
    max_lanes = max(1, min(sizing_budget // max(per_chan * 128, 1), n_lanes))
    if n_lanes >= 2:
        # Keep >= 2 grid steps so both v7x TensorCores get work; one extra
        # grid step is noise on single-TC v5e/v6e.
        max_lanes = max(1, min(max_lanes, n_lanes // 2))
    tile_lanes = max(d for d in range(1, max_lanes + 1) if n_lanes % d == 0)
    c_tile = tile_lanes * 128

    # --- Channels-last, lane-dense layout: (Hp, Wp, NCp) ------------------
    xt = jnp.transpose(xp.reshape(NC, Hp, Wp), (1, 2, 0))
    if NCp != NC:
        xt = jnp.pad(xt, ((0, 0), (0, 0), (0, NCp - NC)))

    if fast3:
        kernel = functools.partial(_median3x3_kernel, out_h=out_h, out_w=out_w)
        flops = 18 * out_h * out_w * NCp
    else:
        kernel = functools.partial(
            _median_generic_kernel, kh=kh, kw=kw, sh=sh, sw=sw,
            out_h=out_h, out_w=out_w)
        flops = _ops_per_window(kk) * out_h * out_w * NCp
    bytes_accessed = (Hp * Wp + out_h * out_w) * NCp * nbytes

    out = pl.pallas_call(
        kernel,
        out_shape=jax.ShapeDtypeStruct((out_h, out_w, NCp), x.dtype),
        grid=(NCp // c_tile,),
        in_specs=[pl.BlockSpec((Hp, Wp, c_tile), lambda i: (0, 0, i))],
        out_specs=pl.BlockSpec((out_h, out_w, c_tile), lambda i: (0, 0, i)),
        compiler_params=pltpu.CompilerParams(
            dimension_semantics=("parallel",),
            vmem_limit_bytes=vmem_limit,
        ),
        cost_estimate=pl.CostEstimate(
            flops=flops, transcendentals=0, bytes_accessed=bytes_accessed
        ),
    )(xt)

    out = jnp.transpose(out[:, :, :NC], (2, 0, 1))
    return out.reshape(N, C, out_h, out_w)


def _reference_median_pool2d(x, kernel_size=3, stride=1, padding=0, same=False):
    """Pure numpy reference replicating the PyTorch forward."""
    kh, kw = _pair(kernel_size)
    sh, sw = _pair(stride)
    x = np.asarray(x)
    N, C, H, W = x.shape
    if same:
        ph = max(kh - sh, 0) if H % sh == 0 else max(kh - H % sh, 0)
        pw = max(kw - sw, 0) if W % sw == 0 else max(kw - W % sw, 0)
        p_l = pw // 2
        p_r = pw - p_l
        p_t = ph // 2
        p_b = ph - p_t
    else:
        p_l, p_r, p_t, p_b = _quadruple(padding)
    xp = np.pad(x, ((0, 0), (0, 0), (p_t, p_b), (p_l, p_r)), mode="reflect")
    Hp, Wp = xp.shape[2:]
    out_h = (Hp - kh) // sh + 1
    out_w = (Wp - kw) // sw + 1
    out = np.empty((N, C, out_h, out_w), dtype=x.dtype)
    for i in range(out_h):
        for j in range(out_w):
            win = xp[:, :, i * sh: i * sh + kh, j * sw: j * sw + kw]
            win = win.reshape(N, C, -1)
            srt = np.sort(win, axis=-1)
            out[:, :, i, j] = srt[:, :, (kh * kw - 1) // 2]  # torch lower median
    return out


if __name__ == "__main__":
    key = jax.random.PRNGKey(0)
    x = jax.random.normal(key, (2, 4, 16, 16), dtype=jnp.float32)

    configs = [
        dict(kernel_size=3, stride=1, padding=0, same=False),  # module defaults (fast path)
        dict(kernel_size=3, stride=1, padding=0, same=True),   # reflect 'same' pad
        dict(kernel_size=2, stride=1, padding=0, same=False),  # even kernel (lower median)
    ]
    for cfg in configs:
        y = jax.block_until_ready(median_pool2d(x, **cfg))
        y_ref = _reference_median_pool2d(np.asarray(x), **cfg)
        assert y.shape == y_ref.shape, (cfg, y.shape, y_ref.shape)
        np.testing.assert_allclose(np.asarray(y), y_ref, rtol=0, atol=0)

    # 0/1-principle exhaustive checks of the selection networks.
    # 3x3 fast path: all 2^9 binary window patterns, one per (N*C) slot.
    pat9 = ((np.arange(512)[:, None] >> np.arange(9)[None, :]) & 1).astype(np.float32)
    x9 = jnp.asarray(pat9.reshape(512, 1, 3, 3))
    y9 = jax.block_until_ready(median_pool2d(x9, kernel_size=3, stride=1, padding=0))
    r9 = _reference_median_pool2d(np.asarray(x9), kernel_size=3, stride=1, padding=0)
    np.testing.assert_allclose(np.asarray(y9), r9, rtol=0, atol=0)

    # Generic (even-kernel) path: all 2^4 binary 2x2 patterns.
    pat4 = ((np.arange(16)[:, None] >> np.arange(4)[None, :]) & 1).astype(np.float32)
    x4 = jnp.asarray(pat4.reshape(16, 1, 2, 2))
    y4 = jax.block_until_ready(median_pool2d(x4, kernel_size=2, stride=1, padding=0))
    r4 = _reference_median_pool2d(np.asarray(x4), kernel_size=2, stride=1, padding=0)
    np.testing.assert_allclose(np.asarray(y4), r4, rtol=0, atol=0)

    print("KERNEL_OK")
</pallas_src>

<mosaic_0001>
module attributes {stable_mosaic.version = 11 : i64} {
  func.func @_median3x3_kernel(%arg0: i32, %arg1: memref<16x16x128xf32, #tpu.memory_space<vmem>>, %arg2: memref<14x14x128xf32, #tpu.memory_space<vmem>>) attributes {dimension_semantics = [#tpu.dimension_semantics<parallel>], iteration_bounds = array<i64: 1>, scalar_prefetch = 0 : i64, scratch_operands = 0 : i64, tpu.core_type = #tpu.core_type<tc>, window_params = [{transform_indices = @transform_0, window_bounds = array<i64: 16, 16, 128>}, {transform_indices = @transform_1, window_bounds = array<i64: 14, 14, 128>}]} {
    %c0 = arith.constant 0 : index
    %c0_0 = arith.constant 0 : index
    %c0_1 = arith.constant 0 : index
    %0 = vector.load %arg1[%c0, %c0_0, %c0_1] : memref<16x16x128xf32, #tpu.memory_space<vmem>>, vector<16x14x128xf32>
    %c0_2 = arith.constant 0 : index
    %c1 = arith.constant 1 : index
    %c0_3 = arith.constant 0 : index
    %1 = vector.load %arg1[%c0_2, %c1, %c0_3] : memref<16x16x128xf32, #tpu.memory_space<vmem>>, vector<16x14x128xf32>
    %c0_4 = arith.constant 0 : index
    %c2 = arith.constant 2 : index
    %c0_5 = arith.constant 0 : index
    %2 = vector.load %arg1[%c0_4, %c2, %c0_5] : memref<16x16x128xf32, #tpu.memory_space<vmem>>, vector<16x14x128xf32>
    %3 = arith.minimumf %0, %1 : vector<16x14x128xf32>
    %4 = arith.maximumf %0, %1 : vector<16x14x128xf32>
    %5 = arith.minimumf %4, %2 : vector<16x14x128xf32>
    %6 = arith.maximumf %4, %2 : vector<16x14x128xf32>
    %7 = arith.minimumf %3, %5 : vector<16x14x128xf32>
    %8 = arith.maximumf %3, %5 : vector<16x14x128xf32>
    %9 = vector.extract_strided_slice %7 {offsets = [0, 0, 0], sizes = [14, 14, 128], strides = [1, 1, 1]} : vector<16x14x128xf32> to vector<14x14x128xf32>
    %10 = vector.extract_strided_slice %7 {offsets = [1, 0, 0], sizes = [14, 14, 128], strides = [1, 1, 1]} : vector<16x14x128xf32> to vector<14x14x128xf32>
    %11 = arith.maximumf %9, %10 : vector<14x14x128xf32>
    %12 = vector.extract_strided_slice %7 {offsets = [2, 0, 0], sizes = [14, 14, 128], strides = [1, 1, 1]} : vector<16x14x128xf32> to vector<14x14x128xf32>
    %13 = arith.maximumf %11, %12 : vector<14x14x128xf32>
    %14 = vector.extract_strided_slice %8 {offsets = [0, 0, 0], sizes = [14, 14, 128], strides = [1, 1, 1]} : vector<16x14x128xf32> to vector<14x14x128xf32>
    %15 = vector.extract_strided_slice %8 {offsets = [1, 0, 0], sizes = [14, 14, 128], strides = [1, 1, 1]} : vector<16x14x128xf32> to vector<14x14x128xf32>
    %16 = vector.extract_strided_slice %8 {offsets = [2, 0, 0], sizes = [14, 14, 128], strides = [1, 1, 1]} : vector<16x14x128xf32> to vector<14x14x128xf32>
    %17 = arith.minimumf %14, %15 : vector<14x14x128xf32>
    %18 = arith.maximumf %14, %15 : vector<14x14x128xf32>
    %19 = arith.minimumf %18, %16 : vector<14x14x128xf32>
    %20 = arith.maximumf %17, %19 : vector<14x14x128xf32>
    %21 = vector.extract_strided_slice %6 {offsets = [0, 0, 0], sizes = [14, 14, 128], strides = [1, 1, 1]} : vector<16x14x128xf32> to vector<14x14x128xf32>
    %22 = vector.extract_strided_slice %6 {offsets = [1, 0, 0], sizes = [14, 14, 128], strides = [1, 1, 1]} : vector<16x14x128xf32> to vector<14x14x128xf32>
    %23 = arith.minimumf %21, %22 : vector<14x14x128xf32>
    %24 = vector.extract_strided_slice %6 {offsets = [2, 0, 0], sizes = [14, 14, 128], strides = [1, 1, 1]} : vector<16x14x128xf32> to vector<14x14x128xf32>
    %25 = arith.minimumf %23, %24 : vector<14x14x128xf32>
    %26 = arith.minimumf %13, %20 : vector<14x14x128xf32>
    %27 = arith.maximumf %13, %20 : vector<14x14x128xf32>
    %28 = arith.minimumf %27, %25 : vector<14x14x128xf32>
    %29 = arith.maximumf %26, %28 : vector<14x14x128xf32>
    %c0_6 = arith.constant 0 : index
    %c0_7 = arith.constant 0 : index
    %c0_8 = arith.constant 0 : index
    %30 = vector.load %arg2[%c0_6, %c0_7, %c0_8] : memref<14x14x128xf32, #tpu.memory_space<vmem>>, vector<14x14x128xf32>
    tpu.vector_store %arg2[%c0_6, %c0_7, %c0_8], %29 {strides = array<i32>} : memref<14x14x128xf32, #tpu.memory_space<vmem>>, vector<14x14x128xf32>,
    return
  }
  func.func @transform_0(%arg0: i32) -> (i32, i32, i32) {
    %c0_i32 = arith.constant 0 : i32
    %c0_i32_0 = arith.constant 0 : i32
    %c0_i32_1 = arith.constant 0 : i32
    return %c0_i32, %c0_i32_0, %arg0 : i32, i32, i32
  }
  func.func @transform_1(%arg0: i32) -> (i32, i32, i32) {
    %c0_i32 = arith.constant 0 : i32
    %c0_i32_0 = arith.constant 0 : i32
    %c0_i32_1 = arith.constant 0 : i32
    return %c0_i32, %c0_i32_0, %arg0 : i32, i32, i32
  }
}

</mosaic_0001>

<llo_original>
// kernel: tpu_custom_call.1
$region0: #{tpu_custom_call.1}
  #allocation0 [shape = 'u32[]', space=smem, size = 0x4, offset = 0x4, fixed_abs, tag = 'smem constant byte address 0x4 - core index']
  #allocation1 [shape = 'u32[144,128]{1,0:T(1,128)}', space=vmem, size = 0x12000, scoped, tag = 'internal scratch']
  %s0 = inlined_call_operand.hbm [shape: f32[16,16,128], index: 0, kind: input, shape index: {}]
  %s1 = inlined_call_operand.hbm [shape: f32[14,14,128], index: 1, kind: output, shape index: {}]
  %s2 = sld [smem:[#allocation0]]
  $region18: #{tpu_custom_call.1} parent=0
    _
  %s4 = ssub.s32 1, %s2
  %s5 = scalar_select 0, %s4, %s2
  $region1: #{tpu_custom_call.1} parent=0
    #allocation2 [shape = 'u8[131072]{0}', space=vmem, size = 0x20000, scoped, tag = 'input window, operand 0, single buffered']
    #allocation3 [shape = 's32[1]{0}', space=sflag, size = 0x4, scoped, tag = 'scoped memory for tpu_custom_call.1']
    #allocation4 [shape = 's32[1]{0}', space=sflag, size = 0x4, scoped, tag = 'scoped memory for tpu_custom_call.1']
    #allocation5 [shape = 'u8[114688]{0}', space=vmem, size = 0x1c000, scoped, tag = 'output window, operand 0, single buffered']
    %6 = vsyncpa [#allocation3], 0
    %7 = vsyncpa [#allocation4], 0
    // Predicated region
    $region2: #{tpu_custom_call.1} parent=1 // pred_check
      _
    $region3: #{tpu_custom_call.1} parent=1 // pred_check_branch
      %9 = sbr.rel (0) target = $region5
    $region4: #{tpu_custom_call.1} parent=1 // pred_region
      %s11 = ssub.s32 4096, 4096
      %12 = vsyncadd [#allocation3], %s11
      %s13 = sshll.u32 [#allocation2], 4
      %s14 = int_to_ptr.vmem [resolvable:$true] %s13
      %19 = dma.hbm_to_vmem [thread:$0]  %s0, 4096, %s14, [#allocation3], 128, 128, 8
    $region5: #{tpu_custom_call.1} parent=1 // pred_fallthru
      _
    // Predicated region
    $region6: #{tpu_custom_call.1} parent=1 // pred_check
      _
    $region7: #{tpu_custom_call.1} parent=1 // pred_check_branch
      %21 = sbr.rel (0) target = $region9
    $region8: #{tpu_custom_call.1} parent=1 // pred_region
      %22 = dma.done [#allocation3], 4096
    $region9: #{tpu_custom_call.1} parent=1 // pred_fallthru
      _
    %v23 = vld [vmem:[#allocation2] sm:$0xff]
    %v24 = vld [vmem:[#allocation2 + $0x8] sm:$0x3f]
    %v25 = vld [vmem:[#allocation2 + $0x10] sm:$0xff]
    %v26 = vld [vmem:[#allocation2 + $0x18] sm:$0x3f]
    %v27 = vld [vmem:[#allocation2 + $0x20] sm:$0xff]
    %v28 = vld [vmem:[#allocation2 + $0x28] sm:$0x3f]
    %v29 = vld [vmem:[#allocation2 + $0x30] sm:$0xff]
    %v30 = vld [vmem:[#allocation2 + $0x38] sm:$0x3f]
    %v31 = vld [vmem:[#allocation2 + $0x40] sm:$0xff]
    %v32 = vld [vmem:[#allocation2 + $0x48] sm:$0x3f]
    %v33 = vld [vmem:[#allocation2 + $0x50] sm:$0xff]
    %v34 = vld [vmem:[#allocation2 + $0x58] sm:$0x3f]
    %v35 = vld [vmem:[#allocation2 + $0x60] sm:$0xff]
    %v36 = vld [vmem:[#allocation2 + $0x68] sm:$0x3f]
    %v37 = vld [vmem:[#allocation2 + $0x70] sm:$0xff]
    %v38 = vld [vmem:[#allocation2 + $0x78] sm:$0x3f]
    %v39 = vld [vmem:[#allocation2 + $0x80] sm:$0xff]
    %v40 = vld [vmem:[#allocation2 + $0x88] sm:$0x3f]
    %v41 = vld [vmem:[#allocation2 + $0x90] sm:$0xff]
    %v42 = vld [vmem:[#allocation2 + $0x98] sm:$0x3f]
    %v43 = vld [vmem:[#allocation2 + $0xa0] sm:$0xff]
    %v44 = vld [vmem:[#allocation2 + $0xa8] sm:$0x3f]
    %v45 = vld [vmem:[#allocation2 + $0xb0] sm:$0xff]
    %v46 = vld [vmem:[#allocation2 + $0xb8] sm:$0x3f]
    %v47 = vld [vmem:[#allocation2 + $0xc0] sm:$0xff]
    %v48 = vld [vmem:[#allocation2 + $0xc8] sm:$0x3f]
    %v49 = vld [vmem:[#allocation2 + $0xd0] sm:$0xff]
    %v50 = vld [vmem:[#allocation2 + $0xd8] sm:$0x3f]
    %v51 = vld [vmem:[#allocation2 + $0xe0] sm:$0xff]
    %v52 = vld [vmem:[#allocation2 + $0xe8] sm:$0x3f]
    %v53 = vld [vmem:[#allocation2 + $0xf0] sm:$0xff]
    %v54 = vld [vmem:[#allocation2 + $0xf8] sm:$0x3f]
    %v55 = vld [vmem:[#allocation2 + $0x1] sm:$0xff]
    %v56 = vld [vmem:[#allocation2 + $0x9] sm:$0x3f]
    %v57 = vld [vmem:[#allocation2 + $0x11] sm:$0xff]
    %v58 = vld [vmem:[#allocation2 + $0x19] sm:$0x3f]
    %v59 = vld [vmem:[#allocation2 + $0x21] sm:$0xff]
    %v60 = vld [vmem:[#allocation2 + $0x29] sm:$0x3f]
    %v61 = vld [vmem:[#allocation2 + $0x31] sm:$0xff]
    %v62 = vld [vmem:[#allocation2 + $0x39] sm:$0x3f]
    %v63 = vld [vmem:[#allocation2 + $0x41] sm:$0xff]
    %v64 = vld [vmem:[#allocation2 + $0x49] sm:$0x3f]
    %v65 = vld [vmem:[#allocation2 + $0x51] sm:$0xff]
    %v66 = vld [vmem:[#allocation2 + $0x59] sm:$0x3f]
    %v67 = vld [vmem:[#allocation2 + $0x61] sm:$0xff]
    %v68 = vld [vmem:[#allocation2 + $0x69] sm:$0x3f]
    %v69 = vld [vmem:[#allocation2 + $0x71] sm:$0xff]
    %v70 = vld [vmem:[#allocation2 + $0x79] sm:$0x3f]
    %v71 = vld [vmem:[#allocation2 + $0x81] sm:$0xff]
    %v72 = vld [vmem:[#allocation2 + $0x89] sm:$0x3f]
    %v73 = vld [vmem:[#allocation2 + $0x91] sm:$0xff]
    %v74 = vld [vmem:[#allocation2 + $0x99] sm:$0x3f]
    %v75 = vld [vmem:[#allocation2 + $0xa1] sm:$0xff]
    %v76 = vld [vmem:[#allocation2 + $0xa9] sm:$0x3f]
    %v77 = vld [vmem:[#allocation2 + $0xb1] sm:$0xff]
    %v78 = vld [vmem:[#allocation2 + $0xb9] sm:$0x3f]
    %v79 = vld [vmem:[#allocation2 + $0xc1] sm:$0xff]
    %v80 = vld [vmem:[#allocation2 + $0xc9] sm:$0x3f]
    %v81 = vld [vmem:[#allocation2 + $0xd1] sm:$0xff]
    %v82 = vld [vmem:[#allocation2 + $0xd9] sm:$0x3f]
    %v83 = vld [vmem:[#allocation2 + $0xe1] sm:$0xff]
    %v84 = vld [vmem:[#allocation2 + $0xe9] sm:$0x3f]
    %v85 = vld [vmem:[#allocation2 + $0xf1] sm:$0xff]
    %v86 = vld [vmem:[#allocation2 + $0xf9] sm:$0x3f]
    %v87 = vld [vmem:[#allocation2 + $0x2] sm:$0xff]
    %v88 = vld [vmem:[#allocation2 + $0xa] sm:$0x3f]
    %v89 = vld [vmem:[#allocation2 + $0x12] sm:$0xff]
    %v90 = vld [vmem:[#allocation2 + $0x1a] sm:$0x3f]
    %v91 = vld [vmem:[#allocation2 + $0x22] sm:$0xff]
    %v92 = vld [vmem:[#allocation2 + $0x2a] sm:$0x3f]
    %v93 = vld [vmem:[#allocation2 + $0x32] sm:$0xff]
    %v94 = vld [vmem:[#allocation2 + $0x3a] sm:$0x3f]
    %v95 = vld [vmem:[#allocation2 + $0x42] sm:$0xff]
    %v96 = vld [vmem:[#allocation2 + $0x4a] sm:$0x3f]
    %v97 = vld [vmem:[#allocation2 + $0x52] sm:$0xff]
    %v98 = vld [vmem:[#allocation2 + $0x5a] sm:$0x3f]
    %v99 = vld [vmem:[#allocation2 + $0x62] sm:$0xff]
    %v100 = vld [vmem:[#allocation2 + $0x6a] sm:$0x3f]
    %v101 = vld [vmem:[#allocation2 + $0x72] sm:$0xff]
    %v102 = vld [vmem:[#allocation2 + $0x7a] sm:$0x3f]
    %v103 = vld [vmem:[#allocation2 + $0x82] sm:$0xff]
    %v104 = vld [vmem:[#allocation2 + $0x8a] sm:$0x3f]
    %v105 = vld [vmem:[#allocation2 + $0x92] sm:$0xff]
    %v106 = vld [vmem:[#allocation2 + $0x9a] sm:$0x3f]
    %v107 = vld [vmem:[#allocation2 + $0xa2] sm:$0xff]
    %v108 = vld [vmem:[#allocation2 + $0xaa] sm:$0x3f]
    %v109 = vld [vmem:[#allocation2 + $0xb2] sm:$0xff]
    %v110 = vld [vmem:[#allocation2 + $0xba] sm:$0x3f]
    %v111 = vld [vmem:[#allocation2 + $0xc2] sm:$0xff]
    %v112 = vld [vmem:[#allocation2 + $0xca] sm:$0x3f]
    %v113 = vld [vmem:[#allocation2 + $0xd2] sm:$0xff]
    %v114 = vld [vmem:[#allocation2 + $0xda] sm:$0x3f]
    %v115 = vld [vmem:[#allocation2 + $0xe2] sm:$0xff]
    %v116 = vld [vmem:[#allocation2 + $0xea] sm:$0x3f]
    %v117 = vld [vmem:[#allocation2 + $0xf2] sm:$0xff]
    %v118 = vld [vmem:[#allocation2 + $0xfa] sm:$0x3f]
    %v119 = vmin.f32 %v23, %v55
    %v120 = vmin.f32 %v24, %v56
    %v121 = vmin.f32 %v25, %v57
    %v122 = vmin.f32 %v26, %v58
    %v123 = vmin.f32 %v27, %v59
    %v124 = vmin.f32 %v28, %v60
    %v125 = vmin.f32 %v29, %v61
    %v126 = vmin.f32 %v30, %v62
    %v127 = vmin.f32 %v31, %v63
    %v128 = vmin.f32 %v32, %v64
    %v129 = vmin.f32 %v33, %v65
    %v130 = vmin.f32 %v34, %v66
    %v131 = vmin.f32 %v35, %v67
    %v132 = vmin.f32 %v36, %v68
    %v133 = vmin.f32 %v37, %v69
    %v134 = vmin.f32 %v38, %v70
    %v135 = vmin.f32 %v39, %v71
    %v136 = vmin.f32 %v40, %v72
    %v137 = vmin.f32 %v41, %v73
    %v138 = vmin.f32 %v42, %v74
    %v139 = vmin.f32 %v43, %v75
    %v140 = vmin.f32 %v44, %v76
    %v141 = vmin.f32 %v45, %v77
    %v142 = vmin.f32 %v46, %v78
    %v143 = vmin.f32 %v47, %v79
    %v144 = vmin.f32 %v48, %v80
    %v145 = vmin.f32 %v49, %v81
    %v146 = vmin.f32 %v50, %v82
    %v147 = vmin.f32 %v51, %v83
    %v148 = vmin.f32 %v52, %v84
    %v149 = vmin.f32 %v53, %v85
    %v150 = vmin.f32 %v54, %v86
    %v151 = vmax.f32 %v23, %v55
    %v152 = vmax.f32 %v24, %v56
    %v153 = vmax.f32 %v25, %v57
    %v154 = vmax.f32 %v26, %v58
    %v155 = vmax.f32 %v27, %v59
    %v156 = vmax.f32 %v28, %v60
    %v157 = vmax.f32 %v29, %v61
    %v158 = vmax.f32 %v30, %v62
    %v159 = vmax.f32 %v31, %v63
    %v160 = vmax.f32 %v32, %v64
    %v161 = vmax.f32 %v33, %v65
    %v162 = vmax.f32 %v34, %v66
    %v163 = vmax.f32 %v35, %v67
    %v164 = vmax.f32 %v36, %v68
    %v165 = vmax.f32 %v37, %v69
    %v166 = vmax.f32 %v38, %v70
    %v167 = vmax.f32 %v39, %v71
    %v168 = vmax.f32 %v40, %v72
    %v169 = vmax.f32 %v41, %v73
    %v170 = vmax.f32 %v42, %v74
    %v171 = vmax.f32 %v43, %v75
    %v172 = vmax.f32 %v44, %v76
    %v173 = vmax.f32 %v45, %v77
    %v174 = vmax.f32 %v46, %v78
    %v175 = vmax.f32 %v47, %v79
    %v176 = vmax.f32 %v48, %v80
    %v177 = vmax.f32 %v49, %v81
    %v178 = vmax.f32 %v50, %v82
    %v179 = vmax.f32 %v51, %v83
    %v180 = vmax.f32 %v52, %v84
    %v181 = vmax.f32 %v53, %v85
    %v182 = vmax.f32 %v54, %v86
    %v183 = vmin.f32 %v151, %v87
    %v184 = vmin.f32 %v152, %v88
    %v185 = vmin.f32 %v153, %v89
    %v186 = vmin.f32 %v154, %v90
    %v187 = vmin.f32 %v155, %v91
    %v188 = vmin.f32 %v156, %v92
    %v189 = vmin.f32 %v157, %v93
    %v190 = vmin.f32 %v158, %v94
    %v191 = vmin.f32 %v159, %v95
    %v192 = vmin.f32 %v160, %v96
    %v193 = vmin.f32 %v161, %v97
    %v194 = vmin.f32 %v162, %v98
    %v195 = vmin.f32 %v163, %v99
    %v196 = vmin.f32 %v164, %v100
    %v197 = vmin.f32 %v165, %v101
    %v198 = vmin.f32 %v166, %v102
    %v199 = vmin.f32 %v167, %v103
    %v200 = vmin.f32 %v168, %v104
    %v201 = vmin.f32 %v169, %v105
    %v202 = vmin.f32 %v170, %v106
    %v203 = vmin.f32 %v171, %v107
    %v204 = vmin.f32 %v172, %v108
    %v205 = vmin.f32 %v173, %v109
    %v206 = vmin.f32 %v174, %v110
    %v207 = vmin.f32 %v175, %v111
    %v208 = vmin.f32 %v176, %v112
    %v209 = vmin.f32 %v177, %v113
    %v210 = vmin.f32 %v178, %v114
    %v211 = vmin.f32 %v179, %v115
    %v212 = vmin.f32 %v180, %v116
    %v213 = vmin.f32 %v181, %v117
    %v214 = vmin.f32 %v182, %v118
    %v215 = vmax.f32 %v151, %v87
    %v216 = vmax.f32 %v152, %v88
    %v217 = vmax.f32 %v153, %v89
    %v218 = vmax.f32 %v154, %v90
    %v219 = vmax.f32 %v155, %v91
    %v220 = vmax.f32 %v156, %v92
    %v221 = vmax.f32 %v157, %v93
    %v222 = vmax.f32 %v158, %v94
    %v223 = vmax.f32 %v159, %v95
    %v224 = vmax.f32 %v160, %v96
    %v225 = vmax.f32 %v161, %v97
    %v226 = vmax.f32 %v162, %v98
    %v227 = vmax.f32 %v163, %v99
    %v228 = vmax.f32 %v164, %v100
    %v229 = vmax.f32 %v165, %v101
    %v230 = vmax.f32 %v166, %v102
    %v231 = vmax.f32 %v167, %v103
    %v232 = vmax.f32 %v168, %v104
    %v233 = vmax.f32 %v169, %v105
    %v234 = vmax.f32 %v170, %v106
    %v235 = vmax.f32 %v171, %v107
    %v236 = vmax.f32 %v172, %v108
    %v237 = vmax.f32 %v173, %v109
    %v238 = vmax.f32 %v174, %v110
    %v239 = vmax.f32 %v175, %v111
    %v240 = vmax.f32 %v176, %v112
    %v241 = vmax.f32 %v177, %v113
    %v242 = vmax.f32 %v178, %v114
    %v243 = vmax.f32 %v179, %v115
    %v244 = vmax.f32 %v180, %v116
    %v245 = vmax.f32 %v181, %v117
    %v246 = vmax.f32 %v182, %v118
    %v247 = vmin.f32 %v119, %v183
    %v248 = vmin.f32 %v120, %v184
    %v249 = vmin.f32 %v121, %v185
    %v250 = vmin.f32 %v122, %v186
    %v251 = vmin.f32 %v123, %v187
    %v252 = vmin.f32 %v124, %v188
    %v253 = vmin.f32 %v125, %v189
    %v254 = vmin.f32 %v126, %v190
    %v255 = vmin.f32 %v127, %v191
    %v256 = vmin.f32 %v128, %v192
    %v257 = vmin.f32 %v129, %v193
    %v258 = vmin.f32 %v130, %v194
    %v259 = vmin.f32 %v131, %v195
    %v260 = vmin.f32 %v132, %v196
    %v261 = vmin.f32 %v133, %v197
    %v262 = vmin.f32 %v134, %v198
    %v263 = vmin.f32 %v135, %v199
    %v264 = vmin.f32 %v136, %v200
    %v265 = vmin.f32 %v137, %v201
    %v266 = vmin.f32 %v138, %v202
    %v267 = vmin.f32 %v139, %v203
    %v268 = vmin.f32 %v140, %v204
    %v269 = vmin.f32 %v141, %v205
    %v270 = vmin.f32 %v142, %v206
    %v271 = vmin.f32 %v143, %v207
    %v272 = vmin.f32 %v144, %v208
    %v273 = vmin.f32 %v145, %v209
    %v274 = vmin.f32 %v146, %v210
    %v275 = vmin.f32 %v147, %v211
    %v276 = vmin.f32 %v148, %v212
    %v277 = vmin.f32 %v149, %v213
    %v278 = vmin.f32 %v150, %v214
    %v279 = vmax.f32 %v119, %v183
    %v280 = vmax.f32 %v120, %v184
    %v281 = vmax.f32 %v121, %v185
    %v282 = vmax.f32 %v122, %v186
    %v283 = vmax.f32 %v123, %v187
    %v284 = vmax.f32 %v124, %v188
    %v285 = vmax.f32 %v125, %v189
    %v286 = vmax.f32 %v126, %v190
    %v287 = vmax.f32 %v127, %v191
    %v288 = vmax.f32 %v128, %v192
    %v289 = vmax.f32 %v129, %v193
    %v290 = vmax.f32 %v130, %v194
    %v291 = vmax.f32 %v131, %v195
    %v292 = vmax.f32 %v132, %v196
    %v293 = vmax.f32 %v133, %v197
    %v294 = vmax.f32 %v134, %v198
    %v295 = vmax.f32 %v135, %v199
    %v296 = vmax.f32 %v136, %v200
    %v297 = vmax.f32 %v137, %v201
    %v298 = vmax.f32 %v138, %v202
    %v299 = vmax.f32 %v139, %v203
    %v300 = vmax.f32 %v140, %v204
    %v301 = vmax.f32 %v141, %v205
    %v302 = vmax.f32 %v142, %v206
    %v303 = vmax.f32 %v143, %v207
    %v304 = vmax.f32 %v144, %v208
    %v305 = vmax.f32 %v145, %v209
    %v306 = vmax.f32 %v146, %v210
    %v307 = vmax.f32 %v147, %v211
    %v308 = vmax.f32 %v148, %v212
    %v309 = vmax.f32 %v149, %v213
    %v310 = vmax.f32 %v150, %v214
    %v311 = vmax.f32 %v247, %v249
    %v312 = vmax.f32 %v248, %v250
    %v313 = vmax.f32 %v249, %v251
    %v314 = vmax.f32 %v250, %v252
    %v315 = vmax.f32 %v251, %v253
    %v316 = vmax.f32 %v252, %v254
    %v317 = vmax.f32 %v253, %v255
    %v318 = vmax.f32 %v254, %v256
    %v319 = vmax.f32 %v255, %v257
    %v320 = vmax.f32 %v256, %v258
    %v321 = vmax.f32 %v257, %v259
    %v322 = vmax.f32 %v258, %v260
    %v323 = vmax.f32 %v259, %v261
    %v324 = vmax.f32 %v260, %v262
    %v325 = vmax.f32 %v261, %v263
    %v326 = vmax.f32 %v262, %v264
    %v327 = vmax.f32 %v263, %v265
    %v328 = vmax.f32 %v264, %v266
    %v329 = vmax.f32 %v265, %v267
    %v330 = vmax.f32 %v266, %v268
    %v331 = vmax.f32 %v267, %v269
    %v332 = vmax.f32 %v268, %v270
    %v333 = vmax.f32 %v269, %v271
    %v334 = vmax.f32 %v270, %v272
    %v335 = vmax.f32 %v271, %v273
    %v336 = vmax.f32 %v272, %v274
    %v337 = vmax.f32 %v273, %v275
    %v338 = vmax.f32 %v274, %v276
    %v339 = vmax.f32 %v311, %v251
    %v340 = vmax.f32 %v312, %v252
    %v341 = vmax.f32 %v313, %v253
    %v342 = vmax.f32 %v314, %v254
    %v343 = vmax.f32 %v315, %v255
    %v344 = vmax.f32 %v316, %v256
    %v345 = vmax.f32 %v317, %v257
    %v346 = vmax.f32 %v318, %v258
    %v347 = vmax.f32 %v319, %v259
    %v348 = vmax.f32 %v320, %v260
    %v349 = vmax.f32 %v321, %v261
    %v350 = vmax.f32 %v322, %v262
    %v351 = vmax.f32 %v323, %v263
    %v352 = vmax.f32 %v324, %v264
    %v353 = vmax.f32 %v325, %v265
    %v354 = vmax.f32 %v326, %v266
    %v355 = vmax.f32 %v327, %v267
    %v356 = vmax.f32 %v328, %v268
    %v357 = vmax.f32 %v329, %v269
    %v358 = vmax.f32 %v330, %v270
    %v359 = vmax.f32 %v331, %v271
    %v360 = vmax.f32 %v332, %v272
    %v361 = vmax.f32 %v333, %v273
    %v362 = vmax.f32 %v334, %v274
    %v363 = vmax.f32 %v335, %v275
    %v364 = vmax.f32 %v336, %v276
    %v365 = vmax.f32 %v337, %v277
    %v366 = vmax.f32 %v338, %v278
    %v367 = vmin.f32 %v279, %v281
    %v368 = vmin.f32 %v280, %v282
    %v369 = vmin.f32 %v281, %v283
    %v370 = vmin.f32 %v282, %v284
    %v371 = vmin.f32 %v283, %v285
    %v372 = vmin.f32 %v284, %v286
    %v373 = vmin.f32 %v285, %v287
    %v374 = vmin.f32 %v286, %v288
    %v375 = vmin.f32 %v287, %v289
    %v376 = vmin.f32 %v288, %v290
    %v377 = vmin.f32 %v289, %v291
    %v378 = vmin.f32 %v290, %v292
    %v379 = vmin.f32 %v291, %v293
    %v380 = vmin.f32 %v292, %v294
    %v381 = vmin.f32 %v293, %v295
    %v382 = vmin.f32 %v294, %v296
    %v383 = vmin.f32 %v295, %v297
    %v384 = vmin.f32 %v296, %v298
    %v385 = vmin.f32 %v297, %v299
    %v386 = vmin.f32 %v298, %v300
    %v387 = vmin.f32 %v299, %v301
    %v388 = vmin.f32 %v300, %v302
    %v389 = vmin.f32 %v301, %v303
    %v390 = vmin.f32 %v302, %v304
    %v391 = vmin.f32 %v303, %v305
    %v392 = vmin.f32 %v304, %v306
    %v393 = vmin.f32 %v305, %v307
    %v394 = vmin.f32 %v306, %v308
    %v395 = vmax.f32 %v279, %v281
    %v396 = vmax.f32 %v280, %v282
    %v397 = vmax.f32 %v281, %v283
    %v398 = vmax.f32 %v282, %v284
    %v399 = vmax.f32 %v283, %v285
    %v400 = vmax.f32 %v284, %v286
    %v401 = vmax.f32 %v285, %v287
    %v402 = vmax.f32 %v286, %v288
    %v403 = vmax.f32 %v287, %v289
    %v404 = vmax.f32 %v288, %v290
    %v405 = vmax.f32 %v289, %v291
    %v406 = vmax.f32 %v290, %v292
    %v407 = vmax.f32 %v291, %v293
    %v408 = vmax.f32 %v292, %v294
    %v409 = vmax.f32 %v293, %v295
    %v410 = vmax.f32 %v294, %v296
    %v411 = vmax.f32 %v295, %v297
    %v412 = vmax.f32 %v296, %v298
    %v413 = vmax.f32 %v297, %v299
    %v414 = vmax.f32 %v298, %v300
    %v415 = vmax.f32 %v299, %v301
    %v416 = vmax.f32 %v300, %v302
    %v417 = vmax.f32 %v301, %v303
    %v418 = vmax.f32 %v302, %v304
    %v419 = vmax.f32 %v303, %v305
    %v420 = vmax.f32 %v304, %v306
    %v421 = vmax.f32 %v305, %v307
    %v422 = vmax.f32 %v306, %v308
    %v423 = vmin.f32 %v395, %v283
    %v424 = vmin.f32 %v396, %v284
    %v425 = vmin.f32 %v397, %v285
    %v426 = vmin.f32 %v398, %v286
    %v427 = vmin.f32 %v399, %v287
    %v428 = vmin.f32 %v400, %v288
    %v429 = vmin.f32 %v401, %v289
    %v430 = vmin.f32 %v402, %v290
    %v431 = vmin.f32 %v403, %v291
    %v432 = vmin.f32 %v404, %v292
    %v433 = vmin.f32 %v405, %v293
    %v434 = vmin.f32 %v406, %v294
    %v435 = vmin.f32 %v407, %v295
    %v436 = vmin.f32 %v408, %v296
    %v437 = vmin.f32 %v409, %v297
    %v438 = vmin.f32 %v410, %v298
    %v439 = vmin.f32 %v411, %v299
    %v440 = vmin.f32 %v412, %v300
    %v441 = vmin.f32 %v413, %v301
    %v442 = vmin.f32 %v414, %v302
    %v443 = vmin.f32 %v415, %v303
    %v444 = vmin.f32 %v416, %v304
    %v445 = vmin.f32 %v417, %v305
    %v446 = vmin.f32 %v418, %v306
    %v447 = vmin.f32 %v419, %v307
    %v448 = vmin.f32 %v420, %v308
    %v449 = vmin.f32 %v421, %v309
    %v450 = vmin.f32 %v422, %v310
    %v451 = vmax.f32 %v367, %v423
    %v452 = vmax.f32 %v368, %v424
    %v453 = vmax.f32 %v369, %v425
    %v454 = vmax.f32 %v370, %v426
    %v455 = vmax.f32 %v371, %v427
    %v456 = vmax.f32 %v372, %v428
    %v457 = vmax.f32 %v373, %v429
    %v458 = vmax.f32 %v374, %v430
    %v459 = vmax.f32 %v375, %v431
    %v460 = vmax.f32 %v376, %v432
    %v461 = vmax.f32 %v377, %v433
    %v462 = vmax.f32 %v378, %v434
    %v463 = vmax.f32 %v379, %v435
    %v464 = vmax.f32 %v380, %v436
    %v465 = vmax.f32 %v381, %v437
    %v466 = vmax.f32 %v382, %v438
    %v467 = vmax.f32 %v383, %v439
    %v468 = vmax.f32 %v384, %v440
    %v469 = vmax.f32 %v385, %v441
    %v470 = vmax.f32 %v386, %v442
    %v471 = vmax.f32 %v387, %v443
    %v472 = vmax.f32 %v388, %v444
    %v473 = vmax.f32 %v389, %v445
    %v474 = vmax.f32 %v390, %v446
    %v475 = vmax.f32 %v391, %v447
    %v476 = vmax.f32 %v392, %v448
    %v477 = vmax.f32 %v393, %v449
    %v478 = vmax.f32 %v394, %v450
    %v479 = vmin.f32 %v215, %v217
    %v480 = vmin.f32 %v216, %v218
    %v481 = vmin.f32 %v217, %v219
    %v482 = vmin.f32 %v218, %v220
    %v483 = vmin.f32 %v219, %v221
    %v484 = vmin.f32 %v220, %v222
    %v485 = vmin.f32 %v221, %v223
    %v486 = vmin.f32 %v222, %v224
    %v487 = vmin.f32 %v223, %v225
    %v488 = vmin.f32 %v224, %v226
    %v489 = vmin.f32 %v225, %v227
    %v490 = vmin.f32 %v226, %v228
    %v491 = vmin.f32 %v227, %v229
    %v492 = vmin.f32 %v228, %v230
    %v493 = vmin.f32 %v229, %v231
    %v494 = vmin.f32 %v230, %v232
    %v495 = vmin.f32 %v231, %v233
    %v496 = vmin.f32 %v232, %v234
    %v497 = vmin.f32 %v233, %v235
    %v498 = vmin.f32 %v234, %v236
    %v499 = vmin.f32 %v235, %v237
    %v500 = vmin.f32 %v236, %v238
    %v501 = vmin.f32 %v237, %v239
    %v502 = vmin.f32 %v238, %v240
    %v503 = vmin.f32 %v239, %v241
    %v504 = vmin.f32 %v240, %v242
    %v505 = vmin.f32 %v241, %v243
    %v506 = vmin.f32 %v242, %v244
    %v507 = vmin.f32 %v479, %v219
    %v508 = vmin.f32 %v480, %v220
    %v509 = vmin.f32 %v481, %v221
    %v510 = vmin.f32 %v482, %v222
    %v511 = vmin.f32 %v483, %v223
    %v512 = vmin.f32 %v484, %v224
    %v513 = vmin.f32 %v485, %v225
    %v514 = vmin.f32 %v486, %v226
    %v515 = vmin.f32 %v487, %v227
    %v516 = vmin.f32 %v488, %v228
    %v517 = vmin.f32 %v489, %v229
    %v518 = vmin.f32 %v490, %v230
    %v519 = vmin.f32 %v491, %v231
    %v520 = vmin.f32 %v492, %v232
    %v521 = vmin.f32 %v493, %v233
    %v522 = vmin.f32 %v494, %v234
    %v523 = vmin.f32 %v495, %v235
    %v524 = vmin.f32 %v496, %v236
    %v525 = vmin.f32 %v497, %v237
    %v526 = vmin.f32 %v498, %v238
    %v527 = vmin.f32 %v499, %v239
    %v528 = vmin.f32 %v500, %v240
    %v529 = vmin.f32 %v501, %v241
    %v530 = vmin.f32 %v502, %v242
    %v531 = vmin.f32 %v503, %v243
    %v532 = vmin.f32 %v504, %v244
    %v533 = vmin.f32 %v505, %v245
    %v534 = vmin.f32 %v506, %v246
    %v535 = vmin.f32 %v339, %v451
    %v536 = vmin.f32 %v340, %v452
    %v537 = vmin.f32 %v341, %v453
    %v538 = vmin.f32 %v342, %v454
    %v539 = vmin.f32 %v343, %v455
    %v540 = vmin.f32 %v344, %v456
    %v541 = vmin.f32 %v345, %v457
    %v542 = vmin.f32 %v346, %v458
    %v543 = vmin.f32 %v347, %v459
    %v544 = vmin.f32 %v348, %v460
    %v545 = vmin.f32 %v349, %v461
    %v546 = vmin.f32 %v350, %v462
    %v547 = vmin.f32 %v351, %v463
    %v548 = vmin.f32 %v352, %v464
    %v549 = vmin.f32 %v353, %v465
    %v550 = vmin.f32 %v354, %v466
    %v551 = vmin.f32 %v355, %v467
    %v552 = vmin.f32 %v356, %v468
    %v553 = vmin.f32 %v357, %v469
    %v554 = vmin.f32 %v358, %v470
    %v555 = vmin.f32 %v359, %v471
    %v556 = vmin.f32 %v360, %v472
    %v557 = vmin.f32 %v361, %v473
    %v558 = vmin.f32 %v362, %v474
    %v559 = vmin.f32 %v363, %v475
    %v560 = vmin.f32 %v364, %v476
    %v561 = vmin.f32 %v365, %v477
    %v562 = vmin.f32 %v366, %v478
    %v563 = vmax.f32 %v339, %v451
    %v564 = vmax.f32 %v340, %v452
    %v565 = vmax.f32 %v341, %v453
    %v566 = vmax.f32 %v342, %v454
    %v567 = vmax.f32 %v343, %v455
    %v568 = vmax.f32 %v344, %v456
    %v569 = vmax.f32 %v345, %v457
    %v570 = vmax.f32 %v346, %v458
    %v571 = vmax.f32 %v347, %v459
    %v572 = vmax.f32 %v348, %v460
    %v573 = vmax.f32 %v349, %v461
    %v574 = vmax.f32 %v350, %v462
    %v575 = vmax.f32 %v351, %v463
    %v576 = vmax.f32 %v352, %v464
    %v577 = vmax.f32 %v353, %v465
    %v578 = vmax.f32 %v354, %v466
    %v579 = vmax.f32 %v355, %v467
    %v580 = vmax.f32 %v356, %v468
    %v581 = vmax.f32 %v357, %v469
    %v582 = vmax.f32 %v358, %v470
    %v583 = vmax.f32 %v359, %v471
    %v584 = vmax.f32 %v360, %v472
    %v585 = vmax.f32 %v361, %v473
    %v586 = vmax.f32 %v362, %v474
    %v587 = vmax.f32 %v363, %v475
    %v588 = vmax.f32 %v364, %v476
    %v589 = vmax.f32 %v365, %v477
    %v590 = vmax.f32 %v366, %v478
    %v591 = vmin.f32 %v563, %v507
    %v592 = vmin.f32 %v564, %v508
    %v593 = vmin.f32 %v565, %v509
    %v594 = vmin.f32 %v566, %v510
    %v595 = vmin.f32 %v567, %v511
    %v596 = vmin.f32 %v568, %v512
    %v597 = vmin.f32 %v569, %v513
    %v598 = vmin.f32 %v570, %v514
    %v599 = vmin.f32 %v571, %v515
    %v600 = vmin.f32 %v572, %v516
    %v601 = vmin.f32 %v573, %v517
    %v602 = vmin.f32 %v574, %v518
    %v603 = vmin.f32 %v575, %v519
    %v604 = vmin.f32 %v576, %v520
    %v605 = vmin.f32 %v577, %v521
    %v606 = vmin.f32 %v578, %v522
    %v607 = vmin.f32 %v579, %v523
    %v608 = vmin.f32 %v580, %v524
    %v609 = vmin.f32 %v581, %v525
    %v610 = vmin.f32 %v582, %v526
    %v611 = vmin.f32 %v583, %v527
    %v612 = vmin.f32 %v584, %v528
    %v613 = vmin.f32 %v585, %v529
    %v614 = vmin.f32 %v586, %v530
    %v615 = vmin.f32 %v587, %v531
    %v616 = vmin.f32 %v588, %v532
    %v617 = vmin.f32 %v589, %v533
    %v618 = vmin.f32 %v590, %v534
    %v619 = vmax.f32 %v535, %v591
    %v620 = vmax.f32 %v536, %v592
    %v621 = vmax.f32 %v537, %v593
    %v622 = vmax.f32 %v538, %v594
    %v623 = vmax.f32 %v539, %v595
    %v624 = vmax.f32 %v540, %v596
    %v625 = vmax.f32 %v541, %v597
    %v626 = vmax.f32 %v542, %v598
    %v627 = vmax.f32 %v543, %v599
    %v628 = vmax.f32 %v544, %v600
    %v629 = vmax.f32 %v545, %v601
    %v630 = vmax.f32 %v546, %v602
    %v631 = vmax.f32 %v547, %v603
    %v632 = vmax.f32 %v548, %v604
    %v633 = vmax.f32 %v549, %v605
    %v634 = vmax.f32 %v550, %v606
    %v635 = vmax.f32 %v551, %v607
    %v636 = vmax.f32 %v552, %v608
    %v637 = vmax.f32 %v553, %v609
    %v638 = vmax.f32 %v554, %v610
    %v639 = vmax.f32 %v555, %v611
    %v640 = vmax.f32 %v556, %v612
    %v641 = vmax.f32 %v557, %v613
    %v642 = vmax.f32 %v558, %v614
    %v643 = vmax.f32 %v559, %v615
    %v644 = vmax.f32 %v560, %v616
    %v645 = vmax.f32 %v561, %v617
    %v646 = vmax.f32 %v562, %v618
    %647 = vst [vmem:[#allocation5] sm:$0xff] %v619
    %648 = vst [vmem:[#allocation5 + $0x8] sm:$0x3f] %v620
    %649 = vst [vmem:[#allocation5 + $0x10] sm:$0xff] %v621
    %650 = vst [vmem:[#allocation5 + $0x18] sm:$0x3f] %v622
    %651 = vst [vmem:[#allocation5 + $0x20] sm:$0xff] %v623
    %652 = vst [vmem:[#allocation5 + $0x28] sm:$0x3f] %v624
    %653 = vst [vmem:[#allocation5 + $0x30] sm:$0xff] %v625
    %654 = vst [vmem:[#allocation5 + $0x38] sm:$0x3f] %v626
    %655 = vst [vmem:[#allocation5 + $0x40] sm:$0xff] %v627
    %656 = vst [vmem:[#allocation5 + $0x48] sm:$0x3f] %v628
    %657 = vst [vmem:[#allocation5 + $0x50] sm:$0xff] %v629
    %658 = vst [vmem:[#allocation5 + $0x58] sm:$0x3f] %v630
    %659 = vst [vmem:[#allocation5 + $0x60] sm:$0xff] %v631
    %660 = vst [vmem:[#allocation5 + $0x68] sm:$0x3f] %v632
    %661 = vst [vmem:[#allocation5 + $0x70] sm:$0xff] %v633
    %662 = vst [vmem:[#allocation5 + $0x78] sm:$0x3f] %v634
    %663 = vst [vmem:[#allocation5 + $0x80] sm:$0xff] %v635
    %664 = vst [vmem:[#allocation5 + $0x88] sm:$0x3f] %v636
    %665 = vst [vmem:[#allocation5 + $0x90] sm:$0xff] %v637
    %666 = vst [vmem:[#allocation5 + $0x98] sm:$0x3f] %v638
    %667 = vst [vmem:[#allocation5 + $0xa0] sm:$0xff] %v639
    %668 = vst [vmem:[#allocation5 + $0xa8] sm:$0x3f] %v640
    %669 = vst [vmem:[#allocation5 + $0xb0] sm:$0xff] %v641
    %670 = vst [vmem:[#allocation5 + $0xb8] sm:$0x3f] %v642
    %671 = vst [vmem:[#allocation5 + $0xc0] sm:$0xff] %v643
    %672 = vst [vmem:[#allocation5 + $0xc8] sm:$0x3f] %v644
    %673 = vst [vmem:[#allocation5 + $0xd0] sm:$0xff] %v645
    %674 = vst [vmem:[#allocation5 + $0xd8] sm:$0x3f] %v646
    // Predicated region
    $region10: #{tpu_custom_call.1} parent=1 // pred_check
      _
    $region11: #{tpu_custom_call.1} parent=1 // pred_check_branch
      %676 = sbr.rel (0) target = $region13
    $region12: #{tpu_custom_call.1} parent=1 // pred_region
      %s678 = ssub.s32 3584, 3584
      %679 = vsyncadd [#allocation4], %s678
      %s680 = sshll.u32 [#allocation5], 4
      %s681 = int_to_ptr.vmem [resolvable:$true] %s680
      %686 = dma.vmem_to_hbm [thread:$0]  %s681, 3584, %s1, [#allocation4], 128, 128, 8
    $region13: #{tpu_custom_call.1} parent=1 // pred_fallthru
      _
    // Predicated region
    $region14: #{tpu_custom_call.1} parent=1 // pred_check
      _
    $region15: #{tpu_custom_call.1} parent=1 // pred_check_branch
      %688 = sbr.rel (0) target = $region17
    $region16: #{tpu_custom_call.1} parent=1 // pred_region
      %689 = dma.done [#allocation4], 3584
    $region17: #{tpu_custom_call.1} parent=1 // pred_fallthru
      _
    %690 = vsyncpa [#allocation3], 1
    %691 = vsyncpa [#allocation4], 1

</llo_original>
